<compile_context>
chip_gen: v5e
topology: v5e:2x2
jax: 0.10.0
libtpu: 0.0.40
codegen_flags: <defaults>
</compile_context>

<pallas_src>
import jax
import jax.numpy as jnp
from jax.experimental import pallas as pl
from jax.experimental.pallas import tpu as pltpu

LEAKY_SLOPE = 0.01
BN_EPS = 1e-5


def _round_up(x, m):
    return (x + m - 1) // m * m


# ----------------------------------------------------------------------------
# Kernel
# ----------------------------------------------------------------------------
def classifier_kernel(x_ref, w_ref, t_ref, out_ref):
    """Fused 4-layer MLP forward for one batch tile.

    x_ref  : (TM, F)     f32   activation tile (streamed over the grid)
    w_ref  : (4, H, H)   bf16  BN-folded weights for fc1..fc3 + zero-padded fc4
    t_ref  : (4, 1, H)   f32   shifts: [t1, t2, t3, b4_padded] (VMEM-resident)
    out_ref: (TM, H)     bf16  lane-dense padded logits
    """
    # Cast to bf16 inside the kernel (hidden under the activation DMA).
    h = x_ref[...].astype(jnp.bfloat16)
    for l in range(3):                               # fc{1,2,3} + bn + leaky_relu
        z = jnp.dot(h, w_ref[l], preferred_element_type=jnp.float32)
        z = z + t_ref[l]                             # folded BN/bias shift (f32)
        z = jnp.maximum(z, LEAKY_SLOPE * z)          # LeakyReLU(0.01); dropout=id
        h = z.astype(jnp.bfloat16)
    # fc4: raw logits (padded columns are exact zeros + zero bias); bf16 store
    # halves HBM writeback while keeping the f32 MXU accumulate.
    logits = jnp.dot(h, w_ref[3], preferred_element_type=jnp.float32) + t_ref[3]
    out_ref[...] = logits.astype(out_ref.dtype)


# ----------------------------------------------------------------------------
# Host-side parameter folding (exact algebra, eval-mode BN)
# ----------------------------------------------------------------------------
def fold_params(params, eps=BN_EPS):
    H = params["w1"].shape[1]
    assert params["w1"].shape[0] == H, "stacking requires input_size == hidden_size"

    def fold(w, b, bn):
        gamma, beta, mean, var = bn
        scale = gamma / jnp.sqrt(var + eps)              # (1, H)
        w_folded = (w * scale).astype(jnp.bfloat16)      # per out-column scale
        shift = beta + (b - mean) * scale                # (1, H), stays f32
        return w_folded, shift

    w1, t1 = fold(params["w1"], params["b1"], params["bn1"])
    w2, t2 = fold(params["w2"], params["b2"], params["bn2"])
    w3, t3 = fold(params["w3"], params["b3"], params["bn3"])

    # Zero-pad fc4 to lane-dense width (padding is exact zeros -> exact logits)
    # and fold it into the same stacked operand.
    out_dim = params["w4"].shape[1]
    w4p = jnp.zeros((H, H), jnp.float32).at[:, :out_dim].set(params["w4"])
    w4p = w4p.astype(jnp.bfloat16)
    b4p = jnp.zeros((1, H), jnp.float32).at[:, :out_dim].set(params["b4"])

    w_stack = jnp.stack([w1, w2, w3, w4p])               # (4, H, H) bf16
    t_stack = jnp.stack([t1, t2, t3, b4p])               # (4, 1, H) f32
    return w_stack, t_stack


# ----------------------------------------------------------------------------
# Tile-size selection
# ----------------------------------------------------------------------------
def _choose_tm(B, *, max_tm=2048, min_steps=2):
    """Batch tile: big enough to amortize ~0.35 us/step, >=2 steps for v7x
    megacore when the batch allows, multiple of 256 rows when large."""
    Bp8 = _round_up(max(B, 8), 8)
    if Bp8 <= 256:
        return Bp8                      # tiny batch: one tile, no extra padding
    tm = _round_up(pl.cdiv(Bp8, min_steps), 256)
    return min(max_tm, tm)


# ----------------------------------------------------------------------------
# Wrapper
# ----------------------------------------------------------------------------
def classifier_forward(x, folded, out_dim, *, tm=None):
    w_stack, t_stack = folded
    B, F = x.shape
    H = w_stack.shape[-1]

    if tm is None:
        tm = _choose_tm(B)
    Bp = _round_up(B, tm)
    x_p = jnp.pad(x, ((0, Bp - B), (0, 0))) if Bp != B else x
    # NOTE: no wrapper-side bf16 cast; the kernel casts after the DMA.

    grid_spec = pltpu.PrefetchScalarGridSpec(
        num_scalar_prefetch=0,
        grid=(Bp // tm,),
        in_specs=[
            pl.BlockSpec((tm, F), lambda i: (i, 0)),       # activations: streamed
            pl.BlockSpec((4, H, H), lambda i: (0, 0, 0)),  # weights: VMEM-resident
            pl.BlockSpec((4, 1, H), lambda i: (0, 0, 0)),  # shifts:  VMEM-resident
        ],
        out_specs=pl.BlockSpec((tm, H), lambda i: (i, 0)), # lane-dense bf16 output
    )

    out = pl.pallas_call(
        classifier_kernel,
        out_shape=jax.ShapeDtypeStruct((Bp, H), jnp.bfloat16),
        grid_spec=grid_spec,
        compiler_params=pltpu.CompilerParams(
            dimension_semantics=("parallel",)),            # batch sharded across TCs (v7x)
    )(x_p, w_stack, t_stack)

    return out[:B, :out_dim]


# ----------------------------------------------------------------------------
# Synthetic parameters + references
# ----------------------------------------------------------------------------
def init_params(key, input_size=128, hidden_size=128, output_size=2):
    """Deterministic synthetic parameters (PyTorch-style uniform init ranges)."""
    ks = jax.random.split(key, 16)
    p = {}

    def linear(kw, kb, fan_in, fan_out):
        bound = 1.0 / jnp.sqrt(fan_in)
        w = jax.random.uniform(kw, (fan_in, fan_out), jnp.float32, -bound, bound)
        b = jax.random.uniform(kb, (1, fan_out), jnp.float32, -bound, bound)
        return w, b

    p["w1"], p["b1"] = linear(ks[0], ks[1], input_size, hidden_size)
    p["w2"], p["b2"] = linear(ks[2], ks[3], hidden_size, hidden_size)
    p["w3"], p["b3"] = linear(ks[4], ks[5], hidden_size, hidden_size)
    p["w4"], p["b4"] = linear(ks[6], ks[7], hidden_size, output_size)

    def bn(kg, kb, km, kv, n):
        gamma = 1.0 + 0.1 * jax.random.normal(kg, (1, n), jnp.float32)
        beta = 0.1 * jax.random.normal(kb, (1, n), jnp.float32)
        mean = 0.05 * jax.random.normal(km, (1, n), jnp.float32)
        var = 0.5 + jax.random.uniform(kv, (1, n), jnp.float32, 0.0, 1.0)
        return gamma, beta, mean, var

    p["bn1"] = bn(ks[8], ks[9], ks[10], ks[11], hidden_size)
    p["bn2"] = bn(ks[12], ks[13], ks[14], ks[15], hidden_size)
    k2 = jax.random.split(jax.random.fold_in(key, 7), 4)
    p["bn3"] = bn(k2[0], k2[1], k2[2], k2[3], hidden_size)
    return p


def reference_forward_f32(x, params):
    """Pure-f32 JAX reference (eval-mode PyTorch semantics)."""
    def layer(h, w, b, bn):
        gamma, beta, mean, var = bn
        z = h @ w + b
        z = (z - mean) / jnp.sqrt(var + BN_EPS) * gamma + beta
        return jnp.where(z > 0, z, LEAKY_SLOPE * z)
    h = layer(x, params["w1"], params["b1"], params["bn1"])
    h = layer(h, params["w2"], params["b2"], params["bn2"])
    h = layer(h, params["w3"], params["b3"], params["bn3"])
    return h @ params["w4"] + params["b4"]


def emulated_forward(x, folded):
    """Plain-JAX emulation of the kernel's bf16/f32 numerics (tight check)."""
    w_stack, t_stack = folded
    h = x.astype(jnp.bfloat16)
    for l in range(3):
        z = jnp.dot(h, w_stack[l], preferred_element_type=jnp.float32) + t_stack[l]
        z = jnp.maximum(z, LEAKY_SLOPE * z)
        h = z.astype(jnp.bfloat16)
    out = jnp.dot(h, w_stack[3], preferred_element_type=jnp.float32) + t_stack[3]
    return out.astype(jnp.bfloat16)


# ----------------------------------------------------------------------------
if __name__ == "__main__":
    key = jax.random.PRNGKey(0)
    kx, kp = jax.random.split(key)

    batch, input_size, hidden_size, output_size = 8, 128, 128, 2
    x = jax.random.normal(kx, (batch, input_size), jnp.float32)
    params = init_params(kp, input_size, hidden_size, output_size)

    folded = fold_params(params)
    out = classifier_forward(x, folded, output_size)
    out = jax.block_until_ready(out)
    assert out.shape == (batch, output_size)

    # Tight check against an emulation of the kernel's exact bf16/f32 numerics.
    emu = emulated_forward(x, folded)[:batch, :output_size]
    assert jnp.allclose(out.astype(jnp.float32), emu.astype(jnp.float32),
                        atol=2e-2, rtol=2e-2), "mismatch vs bf16 emulation"

    # Semantic check against the full-f32 eval-mode reference (bf16-tolerant).
    ref = reference_forward_f32(x, params)
    out_f32 = out.astype(jnp.float32)
    rel_l2 = jnp.linalg.norm(out_f32 - ref) / (jnp.linalg.norm(ref) + 1e-12)
    assert float(rel_l2) < 0.05, f"mismatch vs f32 reference (rel L2 = {rel_l2})"

    print("KERNEL_OK")
</pallas_src>

<mosaic_0001>
module attributes {stable_mosaic.version = 11 : i64} {
  func.func @classifier_kernel(%arg0: i32, %arg1: memref<8x128xf32, #tpu.memory_space<vmem>>, %arg2: memref<4x128x128xbf16, #tpu.memory_space<vmem>>, %arg3: memref<4x1x128xf32, #tpu.memory_space<vmem>>, %arg4: memref<8x128xbf16, #tpu.memory_space<vmem>>) attributes {dimension_semantics = [#tpu.dimension_semantics<parallel>], iteration_bounds = array<i64: 1>, scalar_prefetch = 0 : i64, scratch_operands = 0 : i64, tpu.core_type = #tpu.core_type<tc>, window_params = [{transform_indices = @transform_0, window_bounds = array<i64: 8, 128>}, {pipeline_mode = #tpu.pipeline_mode<synchronous>, transform_indices = @transform_1, window_bounds = array<i64: 4, 128, 128>}, {pipeline_mode = #tpu.pipeline_mode<synchronous>, transform_indices = @transform_2, window_bounds = array<i64: 4, 1, 128>}, {transform_indices = @transform_3, window_bounds = array<i64: 8, 128>}]} {
    %c0 = arith.constant 0 : index
    %c0_0 = arith.constant 0 : index
    %0 = vector.load %arg1[%c0, %c0_0] : memref<8x128xf32, #tpu.memory_space<vmem>>, vector<8x128xf32>
    %1 = arith.truncf %0 : vector<8x128xf32> to vector<8x128xbf16>
    %c0_1 = arith.constant 0 : index
    %c0_2 = arith.constant 0 : index
    %c0_3 = arith.constant 0 : index
    %2 = vector.load %arg2[%c0_1, %c0_2, %c0_3] : memref<4x128x128xbf16, #tpu.memory_space<vmem>>, vector<1x128x128xbf16>
    %3 = vector.shape_cast %2 : vector<1x128x128xbf16> to vector<128x128xbf16>
    %cst = arith.constant dense<0.000000e+00> : vector<8x128xf32>
    %4 = tpu.matmul %1, %3, %cst {dimension_numbers = #tpu.dot_dimension_numbers<[1], [0], [0], [1], [0, 0, 1, 1], [], []>} : vector<8x128xbf16>, vector<128x128xbf16>, vector<8x128xf32> -> vector<8x128xf32>
    %c0_4 = arith.constant 0 : index
    %c0_5 = arith.constant 0 : index
    %c0_6 = arith.constant 0 : index
    %5 = vector.load %arg3[%c0_4, %c0_5, %c0_6] : memref<4x1x128xf32, #tpu.memory_space<vmem>>, vector<1x1x128xf32>
    %6 = vector.shape_cast %5 : vector<1x1x128xf32> to vector<1x128xf32>
    %7 = vector.broadcast %6 : vector<1x128xf32> to vector<8x128xf32>
    %8 = arith.addf %4, %7 : vector<8x128xf32>
    %cst_7 = arith.constant 0.00999999977 : f32
    %9 = vector.broadcast %cst_7 : f32 to vector<8x128xf32>
    %10 = arith.mulf %9, %8 : vector<8x128xf32>
    %11 = arith.maximumf %8, %10 : vector<8x128xf32>
    %12 = arith.truncf %11 : vector<8x128xf32> to vector<8x128xbf16>
    %c1 = arith.constant 1 : index
    %c0_8 = arith.constant 0 : index
    %c0_9 = arith.constant 0 : index
    %13 = vector.load %arg2[%c1, %c0_8, %c0_9] : memref<4x128x128xbf16, #tpu.memory_space<vmem>>, vector<1x128x128xbf16>
    %14 = vector.shape_cast %13 : vector<1x128x128xbf16> to vector<128x128xbf16>
    %cst_10 = arith.constant dense<0.000000e+00> : vector<8x128xf32>
    %15 = tpu.matmul %12, %14, %cst_10 {dimension_numbers = #tpu.dot_dimension_numbers<[1], [0], [0], [1], [0, 0, 1, 1], [], []>} : vector<8x128xbf16>, vector<128x128xbf16>, vector<8x128xf32> -> vector<8x128xf32>
    %c1_11 = arith.constant 1 : index
    %c0_12 = arith.constant 0 : index
    %c0_13 = arith.constant 0 : index
    %16 = vector.load %arg3[%c1_11, %c0_12, %c0_13] : memref<4x1x128xf32, #tpu.memory_space<vmem>>, vector<1x1x128xf32>
    %17 = vector.shape_cast %16 : vector<1x1x128xf32> to vector<1x128xf32>
    %18 = vector.broadcast %17 : vector<1x128xf32> to vector<8x128xf32>
    %19 = arith.addf %15, %18 : vector<8x128xf32>
    %cst_14 = arith.constant 0.00999999977 : f32
    %20 = vector.broadcast %cst_14 : f32 to vector<8x128xf32>
    %21 = arith.mulf %20, %19 : vector<8x128xf32>
    %22 = arith.maximumf %19, %21 : vector<8x128xf32>
    %23 = arith.truncf %22 : vector<8x128xf32> to vector<8x128xbf16>
    %c2 = arith.constant 2 : index
    %c0_15 = arith.constant 0 : index
    %c0_16 = arith.constant 0 : index
    %24 = vector.load %arg2[%c2, %c0_15, %c0_16] : memref<4x128x128xbf16, #tpu.memory_space<vmem>>, vector<1x128x128xbf16>
    %25 = vector.shape_cast %24 : vector<1x128x128xbf16> to vector<128x128xbf16>
    %cst_17 = arith.constant dense<0.000000e+00> : vector<8x128xf32>
    %26 = tpu.matmul %23, %25, %cst_17 {dimension_numbers = #tpu.dot_dimension_numbers<[1], [0], [0], [1], [0, 0, 1, 1], [], []>} : vector<8x128xbf16>, vector<128x128xbf16>, vector<8x128xf32> -> vector<8x128xf32>
    %c2_18 = arith.constant 2 : index
    %c0_19 = arith.constant 0 : index
    %c0_20 = arith.constant 0 : index
    %27 = vector.load %arg3[%c2_18, %c0_19, %c0_20] : memref<4x1x128xf32, #tpu.memory_space<vmem>>, vector<1x1x128xf32>
    %28 = vector.shape_cast %27 : vector<1x1x128xf32> to vector<1x128xf32>
    %29 = vector.broadcast %28 : vector<1x128xf32> to vector<8x128xf32>
    %30 = arith.addf %26, %29 : vector<8x128xf32>
    %cst_21 = arith.constant 0.00999999977 : f32
    %31 = vector.broadcast %cst_21 : f32 to vector<8x128xf32>
    %32 = arith.mulf %31, %30 : vector<8x128xf32>
    %33 = arith.maximumf %30, %32 : vector<8x128xf32>
    %34 = arith.truncf %33 : vector<8x128xf32> to vector<8x128xbf16>
    %c3 = arith.constant 3 : index
    %c0_22 = arith.constant 0 : index
    %c0_23 = arith.constant 0 : index
    %35 = vector.load %arg2[%c3, %c0_22, %c0_23] : memref<4x128x128xbf16, #tpu.memory_space<vmem>>, vector<1x128x128xbf16>
    %36 = vector.shape_cast %35 : vector<1x128x128xbf16> to vector<128x128xbf16>
    %cst_24 = arith.constant dense<0.000000e+00> : vector<8x128xf32>
    %37 = tpu.matmul %34, %36, %cst_24 {dimension_numbers = #tpu.dot_dimension_numbers<[1], [0], [0], [1], [0, 0, 1, 1], [], []>} : vector<8x128xbf16>, vector<128x128xbf16>, vector<8x128xf32> -> vector<8x128xf32>
    %c3_25 = arith.constant 3 : index
    %c0_26 = arith.constant 0 : index
    %c0_27 = arith.constant 0 : index
    %38 = vector.load %arg3[%c3_25, %c0_26, %c0_27] : memref<4x1x128xf32, #tpu.memory_space<vmem>>, vector<1x1x128xf32>
    %39 = vector.shape_cast %38 : vector<1x1x128xf32> to vector<1x128xf32>
    %40 = vector.broadcast %39 : vector<1x128xf32> to vector<8x128xf32>
    %41 = arith.addf %37, %40 : vector<8x128xf32>
    %42 = arith.truncf %41 : vector<8x128xf32> to vector<8x128xbf16>
    %c0_28 = arith.constant 0 : index
    %c0_29 = arith.constant 0 : index
    %43 = vector.load %arg4[%c0_28, %c0_29] : memref<8x128xbf16, #tpu.memory_space<vmem>>, vector<8x128xbf16>
    tpu.vector_store %arg4[%c0_28, %c0_29], %42 {strides = array<i32>} : memref<8x128xbf16, #tpu.memory_space<vmem>>, vector<8x128xbf16>,
    return
  }
  func.func @transform_0(%arg0: i32) -> (i32, i32) {
    %c0_i32 = arith.constant 0 : i32
    %c0_i32_0 = arith.constant 0 : i32
    return %arg0, %c0_i32 : i32, i32
  }
  func.func @transform_1(%arg0: i32) -> (i32, i32, i32) {
    %c0_i32 = arith.constant 0 : i32
    %c0_i32_0 = arith.constant 0 : i32
    %c0_i32_1 = arith.constant 0 : i32
    %c0_i32_2 = arith.constant 0 : i32
    return %c0_i32, %c0_i32_0, %c0_i32_1 : i32, i32, i32
  }
  func.func @transform_2(%arg0: i32) -> (i32, i32, i32) {
    %c0_i32 = arith.constant 0 : i32
    %c0_i32_0 = arith.constant 0 : i32
    %c0_i32_1 = arith.constant 0 : i32
    %c0_i32_2 = arith.constant 0 : i32
    return %c0_i32, %c0_i32_0, %c0_i32_1 : i32, i32, i32
  }
  func.func @transform_3(%arg0: i32) -> (i32, i32) {
    %c0_i32 = arith.constant 0 : i32
    %c0_i32_0 = arith.constant 0 : i32
    return %arg0, %c0_i32 : i32, i32
  }
}

</mosaic_0001>

<llo_original>
// kernel: tpu_custom_call.1
$region0: #{tpu_custom_call.1}
  #allocation0 [shape = 'u32[]', space=smem, size = 0x4, offset = 0x4, fixed_abs, tag = 'smem constant byte address 0x4 - core index']
  #allocation1 [shape = 'u32[72,128]{1,0:T(1,128)}', space=vmem, size = 0x9000, scoped, tag = 'internal scratch']
  %s0 = inlined_call_operand.hbm [shape: f32[8,128], index: 0, kind: input, shape index: {}]
  %s1 = inlined_call_operand.hbm [shape: bf16[4,128,128], index: 1, kind: input, shape index: {}]
  %s2 = inlined_call_operand.hbm [shape: f32[4,1,128], index: 2, kind: input, shape index: {}]
  %s3 = inlined_call_operand.hbm [shape: bf16[8,128], index: 3, kind: output, shape index: {}]
  %s4 = sld [smem:[#allocation0]]
  $region34: #{tpu_custom_call.1} parent=0
    _
  %s6 = ssub.s32 1, %s4
  %s7 = scalar_select 0, %s6, %s4
  $region1: #{tpu_custom_call.1} parent=0
    #allocation2 [shape = 'u8[4096]{0}', space=vmem, size = 0x1000, scoped, tag = 'input window, operand 0, single buffered']
    #allocation3 [shape = 's32[1]{0}', space=sflag, size = 0x4, scoped, tag = 'scoped memory for tpu_custom_call.1']
    #allocation4 [shape = 's32[1]{0}', space=sflag, size = 0x4, scoped, tag = 'scoped memory for tpu_custom_call.1']
    #allocation5 [shape = 'u8[131072]{0}', space=vmem, size = 0x20000, scoped, tag = 'input window, operand 1, single buffered']
    #allocation6 [shape = 's32[1]{0}', space=sflag, size = 0x4, scoped, tag = 'scoped memory for tpu_custom_call.1']
    #allocation7 [shape = 'u8[2048]{0}', space=vmem, size = 0x800, scoped, tag = 'input window, operand 2, single buffered']
    #allocation8 [shape = 'u8[2048]{0}', space=vmem, size = 0x800, scoped, tag = 'output window, operand 0, single buffered']
    %8 = vsyncpa [#allocation3], 0
    %9 = vsyncpa [#allocation6], 0
    %10 = vsyncpa [#allocation4], 0
    // Predicated region
    $region2: #{tpu_custom_call.1} parent=1 // pred_check
      _
    $region3: #{tpu_custom_call.1} parent=1 // pred_check_branch
      %12 = sbr.rel (0) target = $region5
    $region4: #{tpu_custom_call.1} parent=1 // pred_region
      %14 = vsyncadd [#allocation3], 0
      %s16 = sshll.u32 %s0, 4
      %s17 = int_to_ptr.hbm [resolvable:$true] %s16
      %s18 = sshll.u32 [#allocation2], 4
      %s19 = int_to_ptr.vmem [resolvable:$true] %s18
      %21 = dma.hbm_to_vmem [thread:$0]  %s17, 128, %s19, [#allocation3]
    $region5: #{tpu_custom_call.1} parent=1 // pred_fallthru
      _
    // Predicated region
    $region6: #{tpu_custom_call.1} parent=1 // pred_check
      _
    $region7: #{tpu_custom_call.1} parent=1 // pred_check_branch
      %23 = sbr.rel (0) target = $region9
    $region8: #{tpu_custom_call.1} parent=1 // pred_region
      %25 = vsyncadd [#allocation6], 0
      %s26 = sshll.u32 %s1, 4
      %s27 = int_to_ptr.hbm [resolvable:$true] %s26
      %s28 = sshll.u32 [#allocation5], 4
      %s29 = int_to_ptr.vmem [resolvable:$true] %s28
      %34 = dma.hbm_to_vmem [thread:$0]  %s27, 4096, %s29, [#allocation6], 64, 64, 4
    $region9: #{tpu_custom_call.1} parent=1 // pred_fallthru
      _
    // Predicated region
    $region10: #{tpu_custom_call.1} parent=1 // pred_check
      _
    $region11: #{tpu_custom_call.1} parent=1 // pred_check_branch
      %36 = sbr.rel (0) target = $region13
    $region12: #{tpu_custom_call.1} parent=1 // pred_region
      %38 = vsyncadd [#allocation6], 0
      %s39 = sshll.u32 %s2, 4
      %s40 = int_to_ptr.hbm [resolvable:$true] %s39
      %s41 = sshll.u32 [#allocation7], 4
      %s42 = int_to_ptr.vmem [resolvable:$true] %s41
      %47 = dma.hbm_to_vmem [thread:$0]  %s40, 64, %s42, [#allocation6], 16, 16, 1
    $region13: #{tpu_custom_call.1} parent=1 // pred_fallthru
      _
    // Predicated region
    $region14: #{tpu_custom_call.1} parent=1 // pred_check
      _
    $region15: #{tpu_custom_call.1} parent=1 // pred_check_branch
      %49 = sbr.rel (0) target = $region17
    $region16: #{tpu_custom_call.1} parent=1 // pred_region
      %51 = dma.done [#allocation3], 128
    $region17: #{tpu_custom_call.1} parent=1 // pred_fallthru
      _
    // Predicated region
    $region18: #{tpu_custom_call.1} parent=1 // pred_check
      _
    $region19: #{tpu_custom_call.1} parent=1 // pred_check_branch
      %53 = sbr.rel (0) target = $region21
    $region20: #{tpu_custom_call.1} parent=1 // pred_region
      %55 = dma.done [#allocation6], 4096
    $region21: #{tpu_custom_call.1} parent=1 // pred_fallthru
      _
    // Predicated region
    $region22: #{tpu_custom_call.1} parent=1 // pred_check
      _
    $region23: #{tpu_custom_call.1} parent=1 // pred_check_branch
      %57 = sbr.rel (0) target = $region25
    $region24: #{tpu_custom_call.1} parent=1 // pred_region
      %59 = dma.done [#allocation6], 64
    $region25: #{tpu_custom_call.1} parent=1 // pred_fallthru
      _
    %v60 = vld [vmem:[#allocation2] sm:$0xff]
    %v61 = vpack.c.bf16 %v60, %v60
    %v62 = vld [vmem:[#allocation5] sm:$0xf]
    %v63 = vld [vmem:[#allocation5 + $0x4] sm:$0xf]
    %v64 = vld [vmem:[#allocation5 + $0x8] sm:$0xf]
    %v65 = vld [vmem:[#allocation5 + $0xc] sm:$0xf]
    %v66 = vld [vmem:[#allocation5 + $0x10] sm:$0xf]
    %v67 = vld [vmem:[#allocation5 + $0x14] sm:$0xf]
    %v68 = vld [vmem:[#allocation5 + $0x18] sm:$0xf]
    %v69 = vld [vmem:[#allocation5 + $0x1c] sm:$0xf]
    %v70 = vld [vmem:[#allocation5 + $0x20] sm:$0xf]
    %v71 = vld [vmem:[#allocation5 + $0x24] sm:$0xf]
    %v72 = vld [vmem:[#allocation5 + $0x28] sm:$0xf]
    %v73 = vld [vmem:[#allocation5 + $0x2c] sm:$0xf]
    %v74 = vld [vmem:[#allocation5 + $0x30] sm:$0xf]
    %v75 = vld [vmem:[#allocation5 + $0x34] sm:$0xf]
    %v76 = vld [vmem:[#allocation5 + $0x38] sm:$0xf]
    %v77 = vld [vmem:[#allocation5 + $0x3c] sm:$0xf]
    %v78 = vld [vmem:[#allocation7] sm:$0x1]
    %v80 = vperm.slane %v78, 0
    %v98 = vunpack.c.l.b16 %v62
    %v99 = vunpack.c.l.b16 %v63
    %v100 = vunpack.c.l.b16 %v64
    %v101 = vunpack.c.l.b16 %v65
    %v102 = vunpack.c.l.b16 %v66
    %v103 = vunpack.c.l.b16 %v67
    %v104 = vunpack.c.l.b16 %v68
    %v105 = vunpack.c.l.b16 %v69
    %v106 = vunpack.c.l.b16 %v70
    %v107 = vunpack.c.l.b16 %v71
    %v108 = vunpack.c.l.b16 %v72
    %v109 = vunpack.c.l.b16 %v73
    %v110 = vunpack.c.l.b16 %v74
    %v111 = vunpack.c.l.b16 %v75
    %v112 = vunpack.c.l.b16 %v76
    %v113 = vunpack.c.l.b16 %v77
    %v114 = vpack.c.b16 %v99, %v98
    %v115 = vpack.c.b16 %v101, %v100
    %v116 = vpack.c.b16 %v103, %v102
    %v117 = vpack.c.b16 %v105, %v104
    %v118 = vpack.c.b16 %v107, %v106
    %v119 = vpack.c.b16 %v109, %v108
    %v120 = vpack.c.b16 %v111, %v110
    %v121 = vpack.c.b16 %v113, %v112
    %130 = vmatpush.bf16.msra.mxu0 %v121
    %131 = vmatpush.bf16.msra.mxu0 %v120
    %132 = vmatpush.bf16.msra.mxu0 %v119
    %133 = vmatpush.bf16.msra.mxu0 %v118
    %134 = vmatpush.bf16.msra.mxu0 %v117
    %135 = vmatpush.bf16.msra.mxu0 %v116
    %136 = vmatpush.bf16.msra.mxu0 %v115
    %137 = vmatpush.bf16.msra.mxu0 %v114
    %138 = vmatmul.bf16.gmra.mxu0 %v61
    %v139 = vpop.f32.mrf.mxu0
    %v140 = vadd.f32 %v80, %v139
    %v141 = vpop.f32.mrf.mxu0
    %142 = vdwg.mxu0
    %v143 = vmul.f32 %v140, 0.01
    %v144 = vmax.f32 %v140, %v143
    %v145 = vpack.c.bf16 %v144, %v144
    %s146 = scalar_lea.vmem [#allocation5], 64
    %v147 = vld [vmem:[%s146] sm:$0xf]
    %v148 = vld [vmem:[%s146 + $0x4] sm:$0xf]
    %v149 = vld [vmem:[%s146 + $0x8] sm:$0xf]
    %v150 = vld [vmem:[%s146 + $0xc] sm:$0xf]
    %v151 = vld [vmem:[%s146 + $0x10] sm:$0xf]
    %v152 = vld [vmem:[%s146 + $0x14] sm:$0xf]
    %v153 = vld [vmem:[%s146 + $0x18] sm:$0xf]
    %v154 = vld [vmem:[%s146 + $0x1c] sm:$0xf]
    %v155 = vld [vmem:[%s146 + $0x20] sm:$0xf]
    %v156 = vld [vmem:[%s146 + $0x24] sm:$0xf]
    %v157 = vld [vmem:[%s146 + $0x28] sm:$0xf]
    %v158 = vld [vmem:[%s146 + $0x2c] sm:$0xf]
    %v159 = vld [vmem:[%s146 + $0x30] sm:$0xf]
    %v160 = vld [vmem:[%s146 + $0x34] sm:$0xf]
    %v161 = vld [vmem:[%s146 + $0x38] sm:$0xf]
    %v162 = vld [vmem:[%s146 + $0x3c] sm:$0xf]
    %s163 = scalar_lea.vmem [#allocation7], 1
    %v164 = vld [vmem:[%s163] sm:$0x1]
    %v166 = vperm.slane %v164, 0
    %v184 = vunpack.c.l.b16 %v147
    %v185 = vunpack.c.l.b16 %v148
    %v186 = vunpack.c.l.b16 %v149
    %v187 = vunpack.c.l.b16 %v150
    %v188 = vunpack.c.l.b16 %v151
    %v189 = vunpack.c.l.b16 %v152
    %v190 = vunpack.c.l.b16 %v153
    %v191 = vunpack.c.l.b16 %v154
    %v192 = vunpack.c.l.b16 %v155
    %v193 = vunpack.c.l.b16 %v156
    %v194 = vunpack.c.l.b16 %v157
    %v195 = vunpack.c.l.b16 %v158
    %v196 = vunpack.c.l.b16 %v159
    %v197 = vunpack.c.l.b16 %v160
    %v198 = vunpack.c.l.b16 %v161
    %v199 = vunpack.c.l.b16 %v162
    %v200 = vpack.c.b16 %v185, %v184
    %v201 = vpack.c.b16 %v187, %v186
    %v202 = vpack.c.b16 %v189, %v188
    %v203 = vpack.c.b16 %v191, %v190
    %v204 = vpack.c.b16 %v193, %v192
    %v205 = vpack.c.b16 %v195, %v194
    %v206 = vpack.c.b16 %v197, %v196
    %v207 = vpack.c.b16 %v199, %v198
    %216 = vmatpush.bf16.msra.mxu0 %v207
    %217 = vmatpush.bf16.msra.mxu0 %v206
    %218 = vmatpush.bf16.msra.mxu0 %v205
    %219 = vmatpush.bf16.msra.mxu0 %v204
    %220 = vmatpush.bf16.msra.mxu0 %v203
    %221 = vmatpush.bf16.msra.mxu0 %v202
    %222 = vmatpush.bf16.msra.mxu0 %v201
    %223 = vmatpush.bf16.msra.mxu0 %v200
    %224 = vmatmul.bf16.gmra.mxu0 %v145
    %v225 = vpop.f32.mrf.mxu0
    %v226 = vadd.f32 %v166, %v225
    %v227 = vpop.f32.mrf.mxu0
    %228 = vdwg.mxu0
    %v229 = vmul.f32 %v226, 0.01
    %v230 = vmax.f32 %v226, %v229
    %v231 = vpack.c.bf16 %v230, %v230
    %s232 = scalar_lea.vmem [#allocation5], 128
    %v233 = vld [vmem:[%s232] sm:$0xf]
    %v234 = vld [vmem:[%s232 + $0x4] sm:$0xf]
    %v235 = vld [vmem:[%s232 + $0x8] sm:$0xf]
    %v236 = vld [vmem:[%s232 + $0xc] sm:$0xf]
    %v237 = vld [vmem:[%s232 + $0x10] sm:$0xf]
    %v238 = vld [vmem:[%s232 + $0x14] sm:$0xf]
    %v239 = vld [vmem:[%s232 + $0x18] sm:$0xf]
    %v240 = vld [vmem:[%s232 + $0x1c] sm:$0xf]
    %v241 = vld [vmem:[%s232 + $0x20] sm:$0xf]
    %v242 = vld [vmem:[%s232 + $0x24] sm:$0xf]
    %v243 = vld [vmem:[%s232 + $0x28] sm:$0xf]
    %v244 = vld [vmem:[%s232 + $0x2c] sm:$0xf]
    %v245 = vld [vmem:[%s232 + $0x30] sm:$0xf]
    %v246 = vld [vmem:[%s232 + $0x34] sm:$0xf]
    %v247 = vld [vmem:[%s232 + $0x38] sm:$0xf]
    %v248 = vld [vmem:[%s232 + $0x3c] sm:$0xf]
    %s249 = scalar_lea.vmem [#allocation7], 2
    %v250 = vld [vmem:[%s249] sm:$0x1]
    %v252 = vperm.slane %v250, 0
    %v270 = vunpack.c.l.b16 %v233
    %v271 = vunpack.c.l.b16 %v234
    %v272 = vunpack.c.l.b16 %v235
    %v273 = vunpack.c.l.b16 %v236
    %v274 = vunpack.c.l.b16 %v237
    %v275 = vunpack.c.l.b16 %v238
    %v276 = vunpack.c.l.b16 %v239
    %v277 = vunpack.c.l.b16 %v240
    %v278 = vunpack.c.l.b16 %v241
    %v279 = vunpack.c.l.b16 %v242
    %v280 = vunpack.c.l.b16 %v243
    %v281 = vunpack.c.l.b16 %v244
    %v282 = vunpack.c.l.b16 %v245
    %v283 = vunpack.c.l.b16 %v246
    %v284 = vunpack.c.l.b16 %v247
    %v285 = vunpack.c.l.b16 %v248
    %v286 = vpack.c.b16 %v271, %v270
    %v287 = vpack.c.b16 %v273, %v272
    %v288 = vpack.c.b16 %v275, %v274
    %v289 = vpack.c.b16 %v277, %v276
    %v290 = vpack.c.b16 %v279, %v278
    %v291 = vpack.c.b16 %v281, %v280
    %v292 = vpack.c.b16 %v283, %v282
    %v293 = vpack.c.b16 %v285, %v284
    %302 = vmatpush.bf16.msra.mxu0 %v293
    %303 = vmatpush.bf16.msra.mxu0 %v292
    %304 = vmatpush.bf16.msra.mxu0 %v291
    %305 = vmatpush.bf16.msra.mxu0 %v290
    %306 = vmatpush.bf16.msra.mxu0 %v289
    %307 = vmatpush.bf16.msra.mxu0 %v288
    %308 = vmatpush.bf16.msra.mxu0 %v287
    %309 = vmatpush.bf16.msra.mxu0 %v286
    %310 = vmatmul.bf16.gmra.mxu0 %v231
    %v311 = vpop.f32.mrf.mxu0
    %v312 = vadd.f32 %v252, %v311
    %v313 = vpop.f32.mrf.mxu0
    %314 = vdwg.mxu0
    %v315 = vmul.f32 %v312, 0.01
    %v316 = vmax.f32 %v312, %v315
    %v317 = vpack.c.bf16 %v316, %v316
    %s318 = scalar_lea.vmem [#allocation5], 192
    %v319 = vld [vmem:[%s318] sm:$0xf]
    %v320 = vld [vmem:[%s318 + $0x4] sm:$0xf]
    %v321 = vld [vmem:[%s318 + $0x8] sm:$0xf]
    %v322 = vld [vmem:[%s318 + $0xc] sm:$0xf]
    %v323 = vld [vmem:[%s318 + $0x10] sm:$0xf]
    %v324 = vld [vmem:[%s318 + $0x14] sm:$0xf]
    %v325 = vld [vmem:[%s318 + $0x18] sm:$0xf]
    %v326 = vld [vmem:[%s318 + $0x1c] sm:$0xf]
    %v327 = vld [vmem:[%s318 + $0x20] sm:$0xf]
    %v328 = vld [vmem:[%s318 + $0x24] sm:$0xf]
    %v329 = vld [vmem:[%s318 + $0x28] sm:$0xf]
    %v330 = vld [vmem:[%s318 + $0x2c] sm:$0xf]
    %v331 = vld [vmem:[%s318 + $0x30] sm:$0xf]
    %v332 = vld [vmem:[%s318 + $0x34] sm:$0xf]
    %v333 = vld [vmem:[%s318 + $0x38] sm:$0xf]
    %v334 = vld [vmem:[%s318 + $0x3c] sm:$0xf]
    %s335 = scalar_lea.vmem [#allocation7], 3
    %v336 = vld [vmem:[%s335] sm:$0x1]
    %v338 = vperm.slane %v336, 0
    %v356 = vunpack.c.l.b16 %v319
    %v357 = vunpack.c.l.b16 %v320
    %v358 = vunpack.c.l.b16 %v321
    %v359 = vunpack.c.l.b16 %v322
    %v360 = vunpack.c.l.b16 %v323
    %v361 = vunpack.c.l.b16 %v324
    %v362 = vunpack.c.l.b16 %v325
    %v363 = vunpack.c.l.b16 %v326
    %v364 = vunpack.c.l.b16 %v327
    %v365 = vunpack.c.l.b16 %v328
    %v366 = vunpack.c.l.b16 %v329
    %v367 = vunpack.c.l.b16 %v330
    %v368 = vunpack.c.l.b16 %v331
    %v369 = vunpack.c.l.b16 %v332
    %v370 = vunpack.c.l.b16 %v333
    %v371 = vunpack.c.l.b16 %v334
    %v372 = vpack.c.b16 %v357, %v356
    %v373 = vpack.c.b16 %v359, %v358
    %v374 = vpack.c.b16 %v361, %v360
    %v375 = vpack.c.b16 %v363, %v362
    %v376 = vpack.c.b16 %v365, %v364
    %v377 = vpack.c.b16 %v367, %v366
    %v378 = vpack.c.b16 %v369, %v368
    %v379 = vpack.c.b16 %v371, %v370
    %388 = vmatpush.bf16.msra.mxu0 %v379
    %389 = vmatpush.bf16.msra.mxu0 %v378
    %390 = vmatpush.bf16.msra.mxu0 %v377
    %391 = vmatpush.bf16.msra.mxu0 %v376
    %392 = vmatpush.bf16.msra.mxu0 %v375
    %393 = vmatpush.bf16.msra.mxu0 %v374
    %394 = vmatpush.bf16.msra.mxu0 %v373
    %395 = vmatpush.bf16.msra.mxu0 %v372
    %396 = vmatmul.bf16.gmra.mxu0 %v317
    %v397 = vpop.f32.mrf.mxu0
    %v398 = vadd.f32 %v338, %v397
    %v399 = vpop.f32.mrf.mxu0
    %400 = vdwg.mxu0
    %v401 = vpack.c.bf16 %v398, %v398
    %402 = vst [vmem:[#allocation8] sm:$0xf] %v401
    // Predicated region
    $region26: #{tpu_custom_call.1} parent=1 // pred_check
      _
    $region27: #{tpu_custom_call.1} parent=1 // pred_check_branch
      %404 = sbr.rel (0) target = $region29
    $region28: #{tpu_custom_call.1} parent=1 // pred_region
      %406 = vsyncadd [#allocation4], 0
      %s408 = sshll.u32 [#allocation8], 4
      %s409 = int_to_ptr.vmem [resolvable:$true] %s408
      %s410 = sshll.u32 %s3, 4
      %s411 = int_to_ptr.hbm [resolvable:$true] %s410
      %413 = dma.vmem_to_hbm [thread:$0]  %s409, 64, %s411, [#allocation4]
    $region29: #{tpu_custom_call.1} parent=1 // pred_fallthru
      _
    // Predicated region
    $region30: #{tpu_custom_call.1} parent=1 // pred_check
      _
    $region31: #{tpu_custom_call.1} parent=1 // pred_check_branch
      %415 = sbr.rel (0) target = $region33
    $region32: #{tpu_custom_call.1} parent=1 // pred_region
      %417 = dma.done [#allocation4], 64
    $region33: #{tpu_custom_call.1} parent=1 // pred_fallthru
      _
    %418 = vsyncpa [#allocation3], 1
    %419 = vsyncpa [#allocation6], 1
    %420 = vsyncpa [#allocation4], 1

</llo_original>
